<compile_context>
chip_gen: v5e
topology: v5e:2x2
jax: 0.10.0
libtpu: 0.0.40
codegen_flags: <defaults>
</compile_context>

<pallas_src>
import jax
import jax.numpy as jnp
from jax.experimental import pallas as pl
from jax.experimental.pallas import tpu as pltpu


def _round_up(x, m):
    return ((x + m - 1) // m) * m


def _bbox_head_kernel(x_ref, w_ref, b_ref, o_ref, acc_ref):
    """One (tm, tk) x (tk, n_out_pad) partial matmul, accumulated over k."""
    k = pl.program_id(1)

    @pl.when(k == 0)
    def _init():
        acc_ref[...] = jnp.zeros_like(acc_ref)

    acc_ref[...] += jnp.dot(x_ref[...], w_ref[...],
                            preferred_element_type=jnp.float32)

    @pl.when(k == pl.num_programs(1) - 1)
    def _finalize():
        # Fused bias add in the epilogue, then one lane-dense store.
        o_ref[...] = (acc_ref[...] + b_ref[...]).astype(o_ref.dtype)


def pack_bbox_head_params(w_cls, b_cls, w_reg, b_reg, *, d_pad, n_out_pad):
    """One-time weight prep: transpose, fuse cls+reg, zero-pad to tile shapes.

    Do this at model-init time (or under jit where it constant-folds) so the
    transposes are not paid per forward call.
    """
    nc = w_cls.shape[0]
    nr = w_reg.shape[0]
    d = w_cls.shape[1]
    w_cat = jnp.concatenate([w_cls.T, w_reg.T], axis=1)           # (D, nc+nr)
    b_cat = jnp.concatenate([b_cls, b_reg], axis=0)[None, :]      # (1, nc+nr)
    w_pad = jnp.pad(w_cat.astype(jnp.float32),
                    ((0, d_pad - d), (0, n_out_pad - (nc + nr))))
    b_pad = jnp.pad(b_cat.astype(jnp.float32),
                    ((0, 0), (0, n_out_pad - (nc + nr))))
    return w_pad, b_pad


def bbox_head_forward(x_nchw, w_cls, b_cls, w_reg, b_reg,
                      *, tm_max=256, tk_max=1024):
    """BBoxHead.forward (default config).

    Args:
      x_nchw: (N, C, H, W) float32 RoI features.
      w_cls:  (num_classes, D)      float32 (PyTorch nn.Linear layout)
      b_cls:  (num_classes,)        float32
      w_reg:  (4*num_classes, D)    float32
      b_reg:  (4*num_classes,)      float32
    Returns:
      (cls_score, bbox_pred): ((N, num_classes), (N, 4*num_classes)) float32.
    """
    # TODO(synk): with_avg_pool=True branch (nn.AvgPool2d over HxW before the
    # flatten) is not exercised by the default config; it would be a plain-JAX
    # mean over (H, W) ahead of this kernel.
    n = x_nchw.shape[0]
    x_flat = x_nchw.reshape(n, -1)              # matches torch .view(N, -1)
    d = x_flat.shape[1]
    nc = w_cls.shape[0]
    nr = w_reg.shape[0]
    n_out = nc + nr

    # Tile sizes: sublane (rows) 8-aligned, lane (K / out) 128-aligned.
    # tm<=256, tk<=1024 keeps live VMEM small enough for v7x's 64 MiB while
    # still big enough to amortize per-step overhead on v5e/v6e.
    tm = min(tm_max, _round_up(n, 8))
    tk = min(tk_max, _round_up(d, 128))
    n_pad = _round_up(n, tm)
    d_pad = _round_up(d, tk)
    n_out_pad = _round_up(n_out, 128)           # lane-dense output slab

    # Zero-pad activations (zeros contribute nothing to the accumulation).
    x_p = jnp.pad(x_flat.astype(jnp.float32),
                  ((0, n_pad - n), (0, d_pad - d)))
    w_p, b_p = pack_bbox_head_params(w_cls, b_cls, w_reg, b_reg,
                                     d_pad=d_pad, n_out_pad=n_out_pad)

    grid = (n_pad // tm, d_pad // tk)           # (row tiles, K reduction)

    # Rough live-VMEM estimate (double-buffered inputs/outputs + accumulator).
    vmem_bytes = 4 * (2 * tm * tk               # x tiles
                      + 2 * tk * n_out_pad      # weight tiles
                      + 2 * n_out_pad           # bias tile
                      + 2 * tm * n_out_pad      # output tiles
                      + tm * n_out_pad)         # f32 accumulator scratch
    vmem_limit = int(min(max(2 * vmem_bytes, 32 * 1024 * 1024),
                         64 * 1024 * 1024))

    out = pl.pallas_call(
        _bbox_head_kernel,
        out_shape=jax.ShapeDtypeStruct((n_pad, n_out_pad), jnp.float32),
        grid_spec=pltpu.PrefetchScalarGridSpec(
            num_scalar_prefetch=0,
            grid=grid,
            in_specs=[
                pl.BlockSpec((tm, tk), lambda i, k: (i, k)),          # x
                pl.BlockSpec((tk, n_out_pad), lambda i, k: (k, 0)),   # fused W
                pl.BlockSpec((1, n_out_pad), lambda i, k: (0, 0)),    # fused b
            ],
            out_specs=pl.BlockSpec((tm, n_out_pad), lambda i, k: (i, 0)),
            scratch_shapes=[pltpu.VMEM((tm, n_out_pad), jnp.float32)],
        ),
        compiler_params=pltpu.CompilerParams(
            dimension_semantics=("parallel", "arbitrary"),
            vmem_limit_bytes=vmem_limit,
        ),
    )(x_p, w_p, b_p)

    # Slice away row/lane padding and split the fused output back into heads.
    cls_score = out[:n, :nc]
    bbox_pred = out[:n, nc:nc + nr]
    return cls_score, bbox_pred


if __name__ == "__main__":
    # Small deterministic config consistent with BBoxHead (scaled down).
    num_rois = 8
    in_channels = 16
    roi_feat_size = 7
    num_classes = 12
    feat_dim = in_channels * roi_feat_size * roi_feat_size   # 784 (-> padded 896)

    key = jax.random.PRNGKey(0)
    k_x, k_wc, k_wr = jax.random.split(key, 3)

    x = jax.random.normal(
        k_x, (num_rois, in_channels, roi_feat_size, roi_feat_size),
        dtype=jnp.float32)

    # init_weights(): normal(0, 0.01) / normal(0, 0.001), biases = 0
    w_cls = 0.01 * jax.random.normal(k_wc, (num_classes, feat_dim),
                                     dtype=jnp.float32)
    b_cls = jnp.zeros((num_classes,), dtype=jnp.float32)
    w_reg = 0.001 * jax.random.normal(k_wr, (4 * num_classes, feat_dim),
                                      dtype=jnp.float32)
    b_reg = jnp.zeros((4 * num_classes,), dtype=jnp.float32)

    cls_score, bbox_pred = bbox_head_forward(x, w_cls, b_cls, w_reg, b_reg)
    jax.block_until_ready((cls_score, bbox_pred))

    # Sanity check against plain-JAX reference.
    x_flat = x.reshape(num_rois, -1)
    ref_cls = x_flat @ w_cls.T + b_cls
    ref_reg = x_flat @ w_reg.T + b_reg
    assert cls_score.shape == (num_rois, num_classes)
    assert bbox_pred.shape == (num_rois, 4 * num_classes)
    assert jnp.allclose(cls_score, ref_cls, atol=1e-4, rtol=1e-4)
    assert jnp.allclose(bbox_pred, ref_reg, atol=1e-4, rtol=1e-4)

    print("KERNEL_OK")
</pallas_src>

<mosaic_0001>
module attributes {stable_mosaic.version = 11 : i64} {
  func.func @_bbox_head_kernel(%arg0: i32, %arg1: i32, %arg2: memref<8x896xf32, #tpu.memory_space<vmem>>, %arg3: memref<896x128xf32, #tpu.memory_space<vmem>>, %arg4: memref<1x128xf32, #tpu.memory_space<vmem>>, %arg5: memref<8x128xf32, #tpu.memory_space<vmem>>, %arg6: memref<8x128xf32, #tpu.memory_space<vmem>>) attributes {dimension_semantics = [#tpu.dimension_semantics<parallel>, #tpu.dimension_semantics<arbitrary>], iteration_bounds = array<i64: 1, 1>, scalar_prefetch = 0 : i64, scratch_operands = 1 : i64, tpu.core_type = #tpu.core_type<tc>, window_params = [{transform_indices = @transform_0, window_bounds = array<i64: 8, 896>}, {transform_indices = @transform_1, window_bounds = array<i64: 896, 128>}, {pipeline_mode = #tpu.pipeline_mode<synchronous>, transform_indices = @transform_2, window_bounds = array<i64: 1, 128>}, {transform_indices = @transform_3, window_bounds = array<i64: 8, 128>}]} {
    %c0_i32 = arith.constant 0 : i32
    %0 = arith.cmpi eq, %arg1, %c0_i32 : i32
    %1 = arith.extui %0 : i1 to i32
    %c0_i32_0 = arith.constant 0 : i32
    %2 = arith.cmpi ne, %1, %c0_i32_0 : i32
    scf.if %2 {
      %cst_10 = arith.constant 0.000000e+00 : f32
      %12 = vector.broadcast %cst_10 : f32 to vector<8x128xf32>
      %c0_11 = arith.constant 0 : index
      %c0_12 = arith.constant 0 : index
      %13 = vector.load %arg6[%c0_11, %c0_12] : memref<8x128xf32, #tpu.memory_space<vmem>>, vector<8x128xf32>
      tpu.vector_store %arg6[%c0_11, %c0_12], %12 {strides = array<i32>} : memref<8x128xf32, #tpu.memory_space<vmem>>, vector<8x128xf32>,
    } else {
    }
    %c0 = arith.constant 0 : index
    %c0_1 = arith.constant 0 : index
    %3 = vector.load %arg6[%c0, %c0_1] : memref<8x128xf32, #tpu.memory_space<vmem>>, vector<8x128xf32>
    %c0_2 = arith.constant 0 : index
    %c0_3 = arith.constant 0 : index
    %4 = vector.load %arg2[%c0_2, %c0_3] : memref<8x896xf32, #tpu.memory_space<vmem>>, vector<8x896xf32>
    %c0_4 = arith.constant 0 : index
    %c0_5 = arith.constant 0 : index
    %5 = vector.load %arg3[%c0_4, %c0_5] : memref<896x128xf32, #tpu.memory_space<vmem>>, vector<896x128xf32>
    %cst = arith.constant dense<0.000000e+00> : vector<8x128xf32>
    %6 = tpu.matmul %4, %5, %cst {dimension_numbers = #tpu.dot_dimension_numbers<[1], [0], [0], [1], [0, 0, 1, 1], [], []>} : vector<8x896xf32>, vector<896x128xf32>, vector<8x128xf32> -> vector<8x128xf32>
    %7 = arith.addf %3, %6 : vector<8x128xf32>
    %c0_6 = arith.constant 0 : index
    %c0_7 = arith.constant 0 : index
    %8 = vector.load %arg6[%c0_6, %c0_7] : memref<8x128xf32, #tpu.memory_space<vmem>>, vector<8x128xf32>
    tpu.vector_store %arg6[%c0_6, %c0_7], %7 {strides = array<i32>} : memref<8x128xf32, #tpu.memory_space<vmem>>, vector<8x128xf32>,
    %c0_i32_8 = arith.constant 0 : i32
    %9 = arith.cmpi eq, %arg1, %c0_i32_8 : i32
    %10 = arith.extui %9 : i1 to i32
    %c0_i32_9 = arith.constant 0 : i32
    %11 = arith.cmpi ne, %10, %c0_i32_9 : i32
    scf.if %11 {
      %c0_10 = arith.constant 0 : index
      %c0_11 = arith.constant 0 : index
      %12 = vector.load %arg6[%c0_10, %c0_11] : memref<8x128xf32, #tpu.memory_space<vmem>>, vector<8x128xf32>
      %c0_12 = arith.constant 0 : index
      %c0_13 = arith.constant 0 : index
      %13 = vector.load %arg4[%c0_12, %c0_13] : memref<1x128xf32, #tpu.memory_space<vmem>>, vector<1x128xf32>
      %14 = vector.broadcast %13 : vector<1x128xf32> to vector<8x128xf32>
      %15 = arith.addf %12, %14 : vector<8x128xf32>
      %c0_14 = arith.constant 0 : index
      %c0_15 = arith.constant 0 : index
      %16 = vector.load %arg5[%c0_14, %c0_15] : memref<8x128xf32, #tpu.memory_space<vmem>>, vector<8x128xf32>
      tpu.vector_store %arg5[%c0_14, %c0_15], %15 {strides = array<i32>} : memref<8x128xf32, #tpu.memory_space<vmem>>, vector<8x128xf32>,
    } else {
    }
    return
  }
  func.func @transform_0(%arg0: i32, %arg1: i32) -> (i32, i32) {
    %c0_i32 = arith.constant 0 : i32
    return %arg0, %arg1 : i32, i32
  }
  func.func @transform_1(%arg0: i32, %arg1: i32) -> (i32, i32) {
    %c0_i32 = arith.constant 0 : i32
    %c0_i32_0 = arith.constant 0 : i32
    return %arg1, %c0_i32 : i32, i32
  }
  func.func @transform_2(%arg0: i32, %arg1: i32) -> (i32, i32) {
    %c0_i32 = arith.constant 0 : i32
    %c0_i32_0 = arith.constant 0 : i32
    %c0_i32_1 = arith.constant 0 : i32
    return %c0_i32, %c0_i32_0 : i32, i32
  }
  func.func @transform_3(%arg0: i32, %arg1: i32) -> (i32, i32) {
    %c0_i32 = arith.constant 0 : i32
    %c0_i32_0 = arith.constant 0 : i32
    return %arg0, %c0_i32 : i32, i32
  }
}

</mosaic_0001>

<llo_original>
// kernel: tpu_custom_call.1
$region0: #{tpu_custom_call.1}
  #allocation0 [shape = 'u32[]', space=smem, size = 0x4, offset = 0x4, fixed_abs, tag = 'smem constant byte address 0x4 - core index']
  #allocation1 [shape = 'u32[72,128]{1,0:T(1,128)}', space=vmem, size = 0x9000, scoped, tag = 'internal scratch']
  #allocation2 [shape = 'f32[8,128]{1,0:T(8,128)}', space=vmem, size = 0x1000, scoped, tag = 'scratch operand']
  %s0 = inlined_call_operand.hbm [shape: f32[8,896], index: 0, kind: input, shape index: {}]
  %s1 = inlined_call_operand.hbm [shape: f32[896,128], index: 1, kind: input, shape index: {}]
  %s2 = inlined_call_operand.vmem [shape: f32[1,128], index: 2, kind: input, shape index: {}]
  %s3 = inlined_call_operand.hbm [shape: f32[8,128], index: 3, kind: output, shape index: {}]
  %s4 = sld [smem:[#allocation0]]
  $region38: #{tpu_custom_call.1} parent=0
    _
  %s6 = ssub.s32 1, %s4
  %s7 = scalar_select 0, %s6, %s4
  $region1: #{tpu_custom_call.1} parent=0
    #allocation3 [shape = 'u8[28672]{0}', space=vmem, size = 0x7000, scoped, tag = 'input window, operand 0, single buffered']
    #allocation4 [shape = 's32[1]{0}', space=sflag, size = 0x4, scoped, tag = 'scoped memory for tpu_custom_call.1']
    #allocation5 [shape = 's32[1]{0}', space=sflag, size = 0x4, scoped, tag = 'scoped memory for tpu_custom_call.1']
    #allocation6 [shape = 'u8[458752]{0}', space=vmem, size = 0x70000, scoped, tag = 'input window, operand 1, single buffered']
    #allocation7 [shape = 's32[1]{0}', space=sflag, size = 0x4, scoped, tag = 'scoped memory for tpu_custom_call.1']
    #allocation8 [shape = 'u8[4096]{0}', space=vmem, size = 0x1000, scoped, tag = 'output window, operand 0, single buffered']
    %8 = vsyncpa [#allocation4], 0
    %9 = vsyncpa [#allocation7], 0
    %10 = vsyncpa [#allocation5], 0
    // Predicated region
    $region2: #{tpu_custom_call.1} parent=1 // pred_check
      _
    $region3: #{tpu_custom_call.1} parent=1 // pred_check_branch
      %12 = sbr.rel (0) target = $region5
    $region4: #{tpu_custom_call.1} parent=1 // pred_region
      %14 = vsyncadd [#allocation4], 0
      %s16 = sshll.u32 %s0, 4
      %s17 = int_to_ptr.hbm [resolvable:$true] %s16
      %s18 = sshll.u32 [#allocation3], 4
      %s19 = int_to_ptr.vmem [resolvable:$true] %s18
      %21 = dma.hbm_to_vmem [thread:$0]  %s17, 896, %s19, [#allocation4]
    $region5: #{tpu_custom_call.1} parent=1 // pred_fallthru
      _
    // Predicated region
    $region6: #{tpu_custom_call.1} parent=1 // pred_check
      _
    $region7: #{tpu_custom_call.1} parent=1 // pred_check_branch
      %23 = sbr.rel (0) target = $region9
    $region8: #{tpu_custom_call.1} parent=1 // pred_region
      %25 = vsyncadd [#allocation7], 0
      %s26 = sshll.u32 %s1, 4
      %s27 = int_to_ptr.hbm [resolvable:$true] %s26
      %s28 = sshll.u32 [#allocation6], 4
      %s29 = int_to_ptr.vmem [resolvable:$true] %s28
      %34 = dma.hbm_to_vmem [thread:$0]  %s27, 14336, %s29, [#allocation7], 128, 128, 8
    $region9: #{tpu_custom_call.1} parent=1 // pred_fallthru
      _
    // Predicated region
    $region10: #{tpu_custom_call.1} parent=1 // pred_check
      _
    $region11: #{tpu_custom_call.1} parent=1 // pred_check_branch
      %36 = sbr.rel (0) target = $region13
    $region12: #{tpu_custom_call.1} parent=1 // pred_region
      _
    $region13: #{tpu_custom_call.1} parent=1 // pred_fallthru
      _
    // Predicated region
    $region14: #{tpu_custom_call.1} parent=1 // pred_check
      _
    $region15: #{tpu_custom_call.1} parent=1 // pred_check_branch
      %38 = sbr.rel (0) target = $region17
    $region16: #{tpu_custom_call.1} parent=1 // pred_region
      %40 = dma.done [#allocation4], 896
    $region17: #{tpu_custom_call.1} parent=1 // pred_fallthru
      _
    // Predicated region
    $region18: #{tpu_custom_call.1} parent=1 // pred_check
      _
    $region19: #{tpu_custom_call.1} parent=1 // pred_check_branch
      %42 = sbr.rel (0) target = $region21
    $region20: #{tpu_custom_call.1} parent=1 // pred_region
      %44 = dma.done [#allocation7], 14336
    $region21: #{tpu_custom_call.1} parent=1 // pred_fallthru
      _
    %p45 = scmp.eq.s32.totalorder 0, 0
    // Predicated region
    $region22: #{tpu_custom_call.1} parent=1 // pred_check
      %p46 = pneg %p45
    $region23: #{tpu_custom_call.1} parent=1 // pred_check_branch
      %48 = sbr.rel (%p46) target = $region25
    $region24: #{tpu_custom_call.1} parent=1 // pred_region
      %49 = vst [vmem:[#allocation2] sm:$0xff] 0.0
    $region25: #{tpu_custom_call.1} parent=1 // pred_fallthru
      _
    %v50 = vld [vmem:[#allocation2] sm:$0xff]
    %v51 = vld [vmem:[#allocation3] sm:$0xff]
    %v52 = vld [vmem:[#allocation3 + $0x8] sm:$0xff]
    %v53 = vld [vmem:[#allocation3 + $0x10] sm:$0xff]
    %v54 = vld [vmem:[#allocation3 + $0x18] sm:$0xff]
    %v55 = vld [vmem:[#allocation3 + $0x20] sm:$0xff]
    %v56 = vld [vmem:[#allocation3 + $0x28] sm:$0xff]
    %v57 = vld [vmem:[#allocation3 + $0x30] sm:$0xff]
    %v58 = vld [vmem:[#allocation6] sm:$0xff]
    %v59 = vld [vmem:[#allocation6 + $0x8] sm:$0xff]
    %v60 = vld [vmem:[#allocation6 + $0x10] sm:$0xff]
    %v61 = vld [vmem:[#allocation6 + $0x18] sm:$0xff]
    %v62 = vld [vmem:[#allocation6 + $0x20] sm:$0xff]
    %v63 = vld [vmem:[#allocation6 + $0x28] sm:$0xff]
    %v64 = vld [vmem:[#allocation6 + $0x30] sm:$0xff]
    %v65 = vld [vmem:[#allocation6 + $0x38] sm:$0xff]
    %v66 = vld [vmem:[#allocation6 + $0x40] sm:$0xff]
    %v67 = vld [vmem:[#allocation6 + $0x48] sm:$0xff]
    %v68 = vld [vmem:[#allocation6 + $0x50] sm:$0xff]
    %v69 = vld [vmem:[#allocation6 + $0x58] sm:$0xff]
    %v70 = vld [vmem:[#allocation6 + $0x60] sm:$0xff]
    %v71 = vld [vmem:[#allocation6 + $0x68] sm:$0xff]
    %v72 = vld [vmem:[#allocation6 + $0x70] sm:$0xff]
    %v73 = vld [vmem:[#allocation6 + $0x78] sm:$0xff]
    %v74 = vld [vmem:[#allocation6 + $0x80] sm:$0xff]
    %v75 = vld [vmem:[#allocation6 + $0x88] sm:$0xff]
    %v76 = vld [vmem:[#allocation6 + $0x90] sm:$0xff]
    %v77 = vld [vmem:[#allocation6 + $0x98] sm:$0xff]
    %v78 = vld [vmem:[#allocation6 + $0xa0] sm:$0xff]
    %v79 = vld [vmem:[#allocation6 + $0xa8] sm:$0xff]
    %v80 = vld [vmem:[#allocation6 + $0xb0] sm:$0xff]
    %v81 = vld [vmem:[#allocation6 + $0xb8] sm:$0xff]
    %v82 = vld [vmem:[#allocation6 + $0xc0] sm:$0xff]
    %v83 = vld [vmem:[#allocation6 + $0xc8] sm:$0xff]
    %v84 = vld [vmem:[#allocation6 + $0xd0] sm:$0xff]
    %v85 = vld [vmem:[#allocation6 + $0xd8] sm:$0xff]
    %v86 = vld [vmem:[#allocation6 + $0xe0] sm:$0xff]
    %v87 = vld [vmem:[#allocation6 + $0xe8] sm:$0xff]
    %v88 = vld [vmem:[#allocation6 + $0xf0] sm:$0xff]
    %v89 = vld [vmem:[#allocation6 + $0xf8] sm:$0xff]
    %v90 = vld [vmem:[#allocation6 + $0x100] sm:$0xff]
    %v91 = vld [vmem:[#allocation6 + $0x108] sm:$0xff]
    %v92 = vld [vmem:[#allocation6 + $0x110] sm:$0xff]
    %v93 = vld [vmem:[#allocation6 + $0x118] sm:$0xff]
    %v94 = vld [vmem:[#allocation6 + $0x120] sm:$0xff]
    %v95 = vld [vmem:[#allocation6 + $0x128] sm:$0xff]
    %v96 = vld [vmem:[#allocation6 + $0x130] sm:$0xff]
    %v97 = vld [vmem:[#allocation6 + $0x138] sm:$0xff]
    %v98 = vld [vmem:[#allocation6 + $0x140] sm:$0xff]
    %v99 = vld [vmem:[#allocation6 + $0x148] sm:$0xff]
    %v100 = vld [vmem:[#allocation6 + $0x150] sm:$0xff]
    %v101 = vld [vmem:[#allocation6 + $0x158] sm:$0xff]
    %v102 = vld [vmem:[#allocation6 + $0x160] sm:$0xff]
    %v103 = vld [vmem:[#allocation6 + $0x168] sm:$0xff]
    %v104 = vld [vmem:[#allocation6 + $0x170] sm:$0xff]
    %v105 = vld [vmem:[#allocation6 + $0x178] sm:$0xff]
    %v106 = vld [vmem:[#allocation6 + $0x180] sm:$0xff]
    %v107 = vld [vmem:[#allocation6 + $0x188] sm:$0xff]
    %v108 = vld [vmem:[#allocation6 + $0x190] sm:$0xff]
    %v109 = vld [vmem:[#allocation6 + $0x198] sm:$0xff]
    %v110 = vld [vmem:[#allocation6 + $0x1a0] sm:$0xff]
    %v111 = vld [vmem:[#allocation6 + $0x1a8] sm:$0xff]
    %v112 = vld [vmem:[#allocation6 + $0x1b0] sm:$0xff]
    %v113 = vld [vmem:[#allocation6 + $0x1b8] sm:$0xff]
    %v114 = vld [vmem:[#allocation6 + $0x1c0] sm:$0xff]
    %v115 = vld [vmem:[#allocation6 + $0x1c8] sm:$0xff]
    %v116 = vld [vmem:[#allocation6 + $0x1d0] sm:$0xff]
    %v117 = vld [vmem:[#allocation6 + $0x1d8] sm:$0xff]
    %v118 = vld [vmem:[#allocation6 + $0x1e0] sm:$0xff]
    %v119 = vld [vmem:[#allocation6 + $0x1e8] sm:$0xff]
    %v120 = vld [vmem:[#allocation6 + $0x1f0] sm:$0xff]
    %v121 = vld [vmem:[#allocation6 + $0x1f8] sm:$0xff]
    %v122 = vld [vmem:[#allocation6 + $0x200] sm:$0xff]
    %v123 = vld [vmem:[#allocation6 + $0x208] sm:$0xff]
    %v124 = vld [vmem:[#allocation6 + $0x210] sm:$0xff]
    %v125 = vld [vmem:[#allocation6 + $0x218] sm:$0xff]
    %v126 = vld [vmem:[#allocation6 + $0x220] sm:$0xff]
    %v127 = vld [vmem:[#allocation6 + $0x228] sm:$0xff]
    %v128 = vld [vmem:[#allocation6 + $0x230] sm:$0xff]
    %v129 = vld [vmem:[#allocation6 + $0x238] sm:$0xff]
    %v130 = vld [vmem:[#allocation6 + $0x240] sm:$0xff]
    %v131 = vld [vmem:[#allocation6 + $0x248] sm:$0xff]
    %v132 = vld [vmem:[#allocation6 + $0x250] sm:$0xff]
    %v133 = vld [vmem:[#allocation6 + $0x258] sm:$0xff]
    %v134 = vld [vmem:[#allocation6 + $0x260] sm:$0xff]
    %v135 = vld [vmem:[#allocation6 + $0x268] sm:$0xff]
    %v136 = vld [vmem:[#allocation6 + $0x270] sm:$0xff]
    %v137 = vld [vmem:[#allocation6 + $0x278] sm:$0xff]
    %v138 = vld [vmem:[#allocation6 + $0x280] sm:$0xff]
    %v139 = vld [vmem:[#allocation6 + $0x288] sm:$0xff]
    %v140 = vld [vmem:[#allocation6 + $0x290] sm:$0xff]
    %v141 = vld [vmem:[#allocation6 + $0x298] sm:$0xff]
    %v142 = vld [vmem:[#allocation6 + $0x2a0] sm:$0xff]
    %v143 = vld [vmem:[#allocation6 + $0x2a8] sm:$0xff]
    %v144 = vld [vmem:[#allocation6 + $0x2b0] sm:$0xff]
    %v145 = vld [vmem:[#allocation6 + $0x2b8] sm:$0xff]
    %v146 = vld [vmem:[#allocation6 + $0x2c0] sm:$0xff]
    %v147 = vld [vmem:[#allocation6 + $0x2c8] sm:$0xff]
    %v148 = vld [vmem:[#allocation6 + $0x2d0] sm:$0xff]
    %v149 = vld [vmem:[#allocation6 + $0x2d8] sm:$0xff]
    %v150 = vld [vmem:[#allocation6 + $0x2e0] sm:$0xff]
    %v151 = vld [vmem:[#allocation6 + $0x2e8] sm:$0xff]
    %v152 = vld [vmem:[#allocation6 + $0x2f0] sm:$0xff]
    %v153 = vld [vmem:[#allocation6 + $0x2f8] sm:$0xff]
    %v154 = vld [vmem:[#allocation6 + $0x300] sm:$0xff]
    %v155 = vld [vmem:[#allocation6 + $0x308] sm:$0xff]
    %v156 = vld [vmem:[#allocation6 + $0x310] sm:$0xff]
    %v157 = vld [vmem:[#allocation6 + $0x318] sm:$0xff]
    %v158 = vld [vmem:[#allocation6 + $0x320] sm:$0xff]
    %v159 = vld [vmem:[#allocation6 + $0x328] sm:$0xff]
    %v160 = vld [vmem:[#allocation6 + $0x330] sm:$0xff]
    %v161 = vld [vmem:[#allocation6 + $0x338] sm:$0xff]
    %v162 = vld [vmem:[#allocation6 + $0x340] sm:$0xff]
    %v163 = vld [vmem:[#allocation6 + $0x348] sm:$0xff]
    %v164 = vld [vmem:[#allocation6 + $0x350] sm:$0xff]
    %v165 = vld [vmem:[#allocation6 + $0x358] sm:$0xff]
    %v166 = vld [vmem:[#allocation6 + $0x360] sm:$0xff]
    %v167 = vld [vmem:[#allocation6 + $0x368] sm:$0xff]
    %v168 = vld [vmem:[#allocation6 + $0x370] sm:$0xff]
    %v169 = vld [vmem:[#allocation6 + $0x378] sm:$0xff]
    %170 = vmatpush.msra.mxu0 %v73
    %171 = vmatpush.msra.mxu0 %v72
    %172 = vmatpush.msra.mxu0 %v71
    %173 = vmatpush.msra.mxu0 %v70
    %174 = vmatpush.msra.mxu0 %v69
    %175 = vmatpush.msra.mxu0 %v68
    %176 = vmatpush.msra.mxu0 %v67
    %177 = vmatpush.msra.mxu0 %v66
    %178 = vmatpush.msra.mxu0 %v65
    %179 = vmatpush.msra.mxu0 %v64
    %180 = vmatpush.msra.mxu0 %v63
    %181 = vmatpush.msra.mxu0 %v62
    %182 = vmatpush.msra.mxu0 %v61
    %183 = vmatpush.msra.mxu0 %v60
    %184 = vmatpush.msra.mxu0 %v59
    %185 = vmatpush.msra.mxu0 %v58
    %186 = vmatmul.f32.gmra.mxu0 %v51
    %v187 = vpop.f32.mrf.mxu0
    %v188 = vadd.f32 0.0, %v187
    %189 = vdwg.mxu0
    %190 = vmatpush.msra.mxu0 %v89
    %191 = vmatpush.msra.mxu0 %v88
    %192 = vmatpush.msra.mxu0 %v87
    %193 = vmatpush.msra.mxu0 %v86
    %194 = vmatpush.msra.mxu0 %v85
    %195 = vmatpush.msra.mxu0 %v84
    %196 = vmatpush.msra.mxu0 %v83
    %197 = vmatpush.msra.mxu0 %v82
    %198 = vmatpush.msra.mxu0 %v81
    %199 = vmatpush.msra.mxu0 %v80
    %200 = vmatpush.msra.mxu0 %v79
    %201 = vmatpush.msra.mxu0 %v78
    %202 = vmatpush.msra.mxu0 %v77
    %203 = vmatpush.msra.mxu0 %v76
    %204 = vmatpush.msra.mxu0 %v75
    %205 = vmatpush.msra.mxu0 %v74
    %206 = vmatmul.f32.gmra.mxu0 %v52
    %v207 = vpop.f32.mrf.mxu0
    %v208 = vadd.f32 %v188, %v207
    %209 = vdwg.mxu0
    %210 = vmatpush.msra.mxu0 %v105
    %211 = vmatpush.msra.mxu0 %v104
    %212 = vmatpush.msra.mxu0 %v103
    %213 = vmatpush.msra.mxu0 %v102
    %214 = vmatpush.msra.mxu0 %v101
    %215 = vmatpush.msra.mxu0 %v100
    %216 = vmatpush.msra.mxu0 %v99
    %217 = vmatpush.msra.mxu0 %v98
    %218 = vmatpush.msra.mxu0 %v97
    %219 = vmatpush.msra.mxu0 %v96
    %220 = vmatpush.msra.mxu0 %v95
    %221 = vmatpush.msra.mxu0 %v94
    %222 = vmatpush.msra.mxu0 %v93
    %223 = vmatpush.msra.mxu0 %v92
    %224 = vmatpush.msra.mxu0 %v91
    %225 = vmatpush.msra.mxu0 %v90
    %226 = vmatmul.f32.gmra.mxu0 %v53
    %v227 = vpop.f32.mrf.mxu0
    %v228 = vadd.f32 %v208, %v227
    %229 = vdwg.mxu0
    %230 = vmatpush.msra.mxu0 %v121
    %231 = vmatpush.msra.mxu0 %v120
    %232 = vmatpush.msra.mxu0 %v119
    %233 = vmatpush.msra.mxu0 %v118
    %234 = vmatpush.msra.mxu0 %v117
    %235 = vmatpush.msra.mxu0 %v116
    %236 = vmatpush.msra.mxu0 %v115
    %237 = vmatpush.msra.mxu0 %v114
    %238 = vmatpush.msra.mxu0 %v113
    %239 = vmatpush.msra.mxu0 %v112
    %240 = vmatpush.msra.mxu0 %v111
    %241 = vmatpush.msra.mxu0 %v110
    %242 = vmatpush.msra.mxu0 %v109
    %243 = vmatpush.msra.mxu0 %v108
    %244 = vmatpush.msra.mxu0 %v107
    %245 = vmatpush.msra.mxu0 %v106
    %246 = vmatmul.f32.gmra.mxu0 %v54
    %v247 = vpop.f32.mrf.mxu0
    %v248 = vadd.f32 %v228, %v247
    %249 = vdwg.mxu0
    %250 = vmatpush.msra.mxu0 %v137
    %251 = vmatpush.msra.mxu0 %v136
    %252 = vmatpush.msra.mxu0 %v135
    %253 = vmatpush.msra.mxu0 %v134
    %254 = vmatpush.msra.mxu0 %v133
    %255 = vmatpush.msra.mxu0 %v132
    %256 = vmatpush.msra.mxu0 %v131
    %257 = vmatpush.msra.mxu0 %v130
    %258 = vmatpush.msra.mxu0 %v129
    %259 = vmatpush.msra.mxu0 %v128
    %260 = vmatpush.msra.mxu0 %v127
    %261 = vmatpush.msra.mxu0 %v126
    %262 = vmatpush.msra.mxu0 %v125
    %263 = vmatpush.msra.mxu0 %v124
    %264 = vmatpush.msra.mxu0 %v123
    %265 = vmatpush.msra.mxu0 %v122
    %266 = vmatmul.f32.gmra.mxu0 %v55
    %v267 = vpop.f32.mrf.mxu0
    %v268 = vadd.f32 %v248, %v267
    %269 = vdwg.mxu0
    %270 = vmatpush.msra.mxu0 %v153
    %271 = vmatpush.msra.mxu0 %v152
    %272 = vmatpush.msra.mxu0 %v151
    %273 = vmatpush.msra.mxu0 %v150
    %274 = vmatpush.msra.mxu0 %v149
    %275 = vmatpush.msra.mxu0 %v148
    %276 = vmatpush.msra.mxu0 %v147
    %277 = vmatpush.msra.mxu0 %v146
    %278 = vmatpush.msra.mxu0 %v145
    %279 = vmatpush.msra.mxu0 %v144
    %280 = vmatpush.msra.mxu0 %v143
    %281 = vmatpush.msra.mxu0 %v142
    %282 = vmatpush.msra.mxu0 %v141
    %283 = vmatpush.msra.mxu0 %v140
    %284 = vmatpush.msra.mxu0 %v139
    %285 = vmatpush.msra.mxu0 %v138
    %286 = vmatmul.f32.gmra.mxu0 %v56
    %v287 = vpop.f32.mrf.mxu0
    %v288 = vadd.f32 %v268, %v287
    %289 = vdwg.mxu0
    %290 = vmatpush.msra.mxu0 %v169
    %291 = vmatpush.msra.mxu0 %v168
    %292 = vmatpush.msra.mxu0 %v167
    %293 = vmatpush.msra.mxu0 %v166
    %294 = vmatpush.msra.mxu0 %v165
    %295 = vmatpush.msra.mxu0 %v164
    %296 = vmatpush.msra.mxu0 %v163
    %297 = vmatpush.msra.mxu0 %v162
    %298 = vmatpush.msra.mxu0 %v161
    %299 = vmatpush.msra.mxu0 %v160
    %300 = vmatpush.msra.mxu0 %v159
    %301 = vmatpush.msra.mxu0 %v158
    %302 = vmatpush.msra.mxu0 %v157
    %303 = vmatpush.msra.mxu0 %v156
    %304 = vmatpush.msra.mxu0 %v155
    %305 = vmatpush.msra.mxu0 %v154
    %306 = vmatmul.f32.gmra.mxu0 %v57
    %v307 = vpop.f32.mrf.mxu0
    %v308 = vadd.f32 %v288, %v307
    %309 = vdwg.mxu0
    %v310 = vadd.f32 %v50, %v308
    %311 = vst [vmem:[#allocation2] sm:$0xff] %v310
    // Predicated region
    $region26: #{tpu_custom_call.1} parent=1 // pred_check
      %p312 = pneg %p45
    $region27: #{tpu_custom_call.1} parent=1 // pred_check_branch
      %314 = sbr.rel (%p312) target = $region29
    $region28: #{tpu_custom_call.1} parent=1 // pred_region
      %v315 = vld [vmem:[#allocation2] sm:$0xff]
      %v316 = vld [vmem:[%s2] sm:$0x1]
      %v318 = vperm.slane %v316, 0
      %v320 = vadd.f32 %v315, %v318
      %321 = vst [vmem:[#allocation8] sm:$0xff] %v320
    $region29: #{tpu_custom_call.1} parent=1 // pred_fallthru
      _
    // Predicated region
    $region30: #{tpu_custom_call.1} parent=1 // pred_check
      _
    $region31: #{tpu_custom_call.1} parent=1 // pred_check_branch
      %323 = sbr.rel (0) target = $region33
    $region32: #{tpu_custom_call.1} parent=1 // pred_region
      %325 = vsyncadd [#allocation5], 0
      %s327 = sshll.u32 [#allocation8], 4
      %s328 = int_to_ptr.vmem [resolvable:$true] %s327
      %s329 = sshll.u32 %s3, 4
      %s330 = int_to_ptr.hbm [resolvable:$true] %s329
      %332 = dma.vmem_to_hbm [thread:$0]  %s328, 128, %s330, [#allocation5]
    $region33: #{tpu_custom_call.1} parent=1 // pred_fallthru
      _
    // Predicated region
    $region34: #{tpu_custom_call.1} parent=1 // pred_check
      _
    $region35: #{tpu_custom_call.1} parent=1 // pred_check_branch
      %334 = sbr.rel (0) target = $region37
    $region36: #{tpu_custom_call.1} parent=1 // pred_region
      %336 = dma.done [#allocation5], 128
    $region37: #{tpu_custom_call.1} parent=1 // pred_fallthru
      _
    %337 = vsyncpa [#allocation4], 1
    %338 = vsyncpa [#allocation7], 1
    %339 = vsyncpa [#allocation5], 1

</llo_original>
